<compile_context>
chip_gen: v5e
topology: v5e:2x2
jax: 0.10.0
libtpu: 0.0.40
codegen_flags: <defaults>
</compile_context>

<pallas_src>
import functools

import jax
import jax.numpy as jnp
from jax import lax
from jax.experimental import pallas as pl
from jax.experimental.pallas import tpu as pltpu


def _round_up(x, m):
    return (x + m - 1) // m * m


# --------------------------------------------------------------------------
# Kernel bodies
# --------------------------------------------------------------------------
def _sigmoid(x):
    # sigmoid(x) == 0.5 * tanh(0.5 * x) + 0.5 : single EUP op, exact.
    return 0.5 * jnp.tanh(0.5 * x) + 0.5


def _gru_ode_cell(h, whzT_ref, whnT_ref):
    """One GRUODECell_Autonomous evaluation.

    h:        (TB, Hp) float32
    whzT_ref: (Hp, Hp) bfloat16 VMEM ref, pre-transposed to (in, out)
    whnT_ref: (Hp, Hp) bfloat16 VMEM ref, pre-transposed to (in, out)
    returns dh: (TB, Hp) float32
    """
    hz = jnp.dot(h.astype(jnp.bfloat16), whzT_ref[...],
                 preferred_element_type=jnp.float32)
    z = _sigmoid(hz)
    hn = jnp.dot((z * h).astype(jnp.bfloat16), whnT_ref[...],
                 preferred_element_type=jnp.float32)
    n = jnp.tanh(hn)
    return (1.0 - z) * (n - h)


def _dh_kernel(h_ref, whzT_ref, whnT_ref, dh_ref):
    """Single cell evaluation: dh = gru_c(t, h)."""
    h = h_ref[...].astype(jnp.float32)
    dh_ref[...] = _gru_ode_cell(h, whzT_ref, whnT_ref).astype(dh_ref.dtype)


def _euler_kernel(h_ref, whzT_ref, whnT_ref, out_ref, *,
                  delta_t, n_steps, unroll):
    """Fused Euler integration: h <- h + delta_t * gru_c(t, h), n_steps times.

    Weights stay resident in VMEM for the whole integration (re-read per step
    through the refs -> idle vld slots, no register spill at larger H).
    """
    h0 = h_ref[...].astype(jnp.float32)

    def body(_, h):
        return h + delta_t * _gru_ode_cell(h, whzT_ref, whnT_ref)

    h_final = lax.fori_loop(0, n_steps, body, h0, unroll=unroll)
    out_ref[...] = h_final.astype(out_ref.dtype)


# --------------------------------------------------------------------------
# Wrappers (layout plumbing)
# --------------------------------------------------------------------------
def prepare_weights(w_hz, w_hn):
    """One-time parameter prep: transpose (out,in)->(in,out), bf16, lane-pad.

    Do this once at parameter setup and reuse the result across calls; only
    the hidden state is padded per call.
    """
    H = w_hz.shape[0]
    Hp = _round_up(max(H, 128), 128)
    wzT = jnp.zeros((Hp, Hp), jnp.bfloat16).at[:H, :H].set(
        jnp.asarray(w_hz).T.astype(jnp.bfloat16))
    wnT = jnp.zeros((Hp, Hp), jnp.bfloat16).at[:H, :H].set(
        jnp.asarray(w_hn).T.astype(jnp.bfloat16))
    return {"wzT": wzT, "wnT": wnT, "H": H, "Hp": Hp}


def _pad_h(h, Hp):
    """Pad hidden state to a lane-dense, sublane-packed tile grid.

    Padded rows/columns provably stay zero across Euler steps
    (h=0 -> z=0.5, n=0 -> dh=0), so no masking is needed.
    """
    B, H = h.shape
    # bf16 packs 16 rows per vreg -> pad the batch tile to at least 16.
    TB = 128 if B > 128 else _round_up(max(B, 16), 8)
    Bp = _round_up(B, TB)
    h_p = jnp.zeros((Bp, Hp), h.dtype).at[:B, :H].set(h)
    return h_p, TB


def _run(kernel, h_p, TB, wzT, wnT, out_dtype, *, flops, transcendentals):
    Bp, Hp = h_p.shape
    bytes_accessed = 2 * Hp * Hp * 2 + 2 * Bp * Hp * 4
    return pl.pallas_call(
        kernel,
        out_shape=jax.ShapeDtypeStruct((Bp, Hp), out_dtype),
        grid_spec=pltpu.PrefetchScalarGridSpec(
            num_scalar_prefetch=0,
            grid=(Bp // TB,),          # batch tiles: parallel (v7x megacore)
            in_specs=[
                pl.BlockSpec((TB, Hp), lambda i: (i, 0)),
                pl.BlockSpec((Hp, Hp), lambda i: (0, 0)),
                pl.BlockSpec((Hp, Hp), lambda i: (0, 0)),
            ],
            out_specs=pl.BlockSpec((TB, Hp), lambda i: (i, 0)),
        ),
        compiler_params=pltpu.CompilerParams(
            dimension_semantics=("parallel",),
        ),
        cost_estimate=pl.CostEstimate(
            flops=flops,
            transcendentals=transcendentals,
            bytes_accessed=bytes_accessed,
        ),
    )(h_p, wzT, wnT)


def gru_ode_autonomous(t, h, params):
    """GRUODECell_Autonomous.forward: returns dh (same API as the module)."""
    del t  # the autonomous cell ignores time
    B, H = h.shape
    Hp = params["Hp"]
    h_p, TB = _pad_h(h, Hp)
    Bp = h_p.shape[0]
    dh_p = _run(
        _dh_kernel, h_p, TB, params["wzT"], params["wnT"], h.dtype,
        flops=2 * 2 * Bp * Hp * Hp,
        transcendentals=2 * Bp * Hp,
    )
    return dh_p[:B, :H]


def gru_ode_autonomous_euler(h0, params, delta_t, n_steps):
    """Fused n_steps of NNFOwithBayesianJumps.ode_step (euler, impute=False)."""
    B, H = h0.shape
    Hp = params["Hp"]
    h_p, TB = _pad_h(h0, Hp)
    Bp = h_p.shape[0]
    n_steps = int(n_steps)
    kernel = functools.partial(
        _euler_kernel,
        delta_t=float(delta_t),
        n_steps=n_steps,
        unroll=min(4, max(1, n_steps)),   # serial chain: cap the unroll
    )
    hT_p = _run(
        kernel, h_p, TB, params["wzT"], params["wnT"], h0.dtype,
        flops=n_steps * 2 * 2 * Bp * Hp * Hp,
        transcendentals=n_steps * 2 * Bp * Hp,
    )
    return hT_p[:B, :H]


# --------------------------------------------------------------------------
# Pure-JAX f32 references matching the PyTorch forward exactly
# --------------------------------------------------------------------------
def reference_dh(h, w_hz, w_hn):
    x = jnp.zeros_like(h)
    z = jax.nn.sigmoid(x + h @ w_hz.T)
    n = jnp.tanh(x + (z * h) @ w_hn.T)
    return (1.0 - z) * (n - h)


def reference_euler(h0, w_hz, w_hn, delta_t, n_steps):
    h = h0
    for _ in range(n_steps):
        h = h + delta_t * reference_dh(h, w_hz, w_hn)
    return h


if __name__ == "__main__":
    hidden_size = 32
    batch = 4
    delta_t = 0.05
    n_steps = 16

    key = jax.random.PRNGKey(0)
    k_h, k_wz, k_wn = jax.random.split(key, 3)

    # Deterministic synthetic parameters (PyTorch Linear shape: (out, in)).
    bound = 1.0 / (hidden_size ** 0.5)
    w_hz = jax.random.uniform(
        k_wz, (hidden_size, hidden_size), jnp.float32, -bound, bound)
    w_hn = jax.random.uniform(
        k_wn, (hidden_size, hidden_size), jnp.float32, -bound, bound)
    h = jax.random.normal(k_h, (batch, hidden_size), jnp.float32)
    t = 0.0  # unused by the autonomous cell

    # One-time parameter prep (hoisted out of the per-call path).
    params = prepare_weights(w_hz, w_hn)
    params = jax.tree_util.tree_map(
        lambda a: jax.block_until_ready(a) if isinstance(a, jax.Array) else a,
        params)

    # Single-step dh (module forward semantics).
    dh = jax.block_until_ready(gru_ode_autonomous(t, h, params))
    ref_dh = reference_dh(h, w_hz, w_hn)
    assert dh.shape == (batch, hidden_size)
    err_dh = float(jnp.max(jnp.abs(dh - ref_dh)))
    assert err_dh < 2e-2, f"dh max abs err {err_dh}"

    # Fused Euler integration (the ode_step loop of NNFOwithBayesianJumps).
    hT = jax.block_until_ready(
        gru_ode_autonomous_euler(h, params, delta_t, n_steps))
    ref_hT = reference_euler(h, w_hz, w_hn, delta_t, n_steps)
    assert hT.shape == (batch, hidden_size)
    err_hT = float(jnp.max(jnp.abs(hT - ref_hT)))
    assert err_hT < 2e-2, f"h(T) max abs err {err_hT}"

    print("KERNEL_OK")
</pallas_src>

<mosaic_0001>
module attributes {stable_mosaic.version = 11 : i64} {
  func.func @_dh_kernel(%arg0: i32, %arg1: memref<16x128xf32, #tpu.memory_space<vmem>>, %arg2: memref<128x128xbf16, #tpu.memory_space<vmem>>, %arg3: memref<128x128xbf16, #tpu.memory_space<vmem>>, %arg4: memref<16x128xf32, #tpu.memory_space<vmem>>) attributes {dimension_semantics = [#tpu.dimension_semantics<parallel>], iteration_bounds = array<i64: 1>, scalar_prefetch = 0 : i64, scratch_operands = 0 : i64, tpu.core_type = #tpu.core_type<tc>, window_params = [{transform_indices = @transform_0, window_bounds = array<i64: 16, 128>}, {pipeline_mode = #tpu.pipeline_mode<synchronous>, transform_indices = @transform_1, window_bounds = array<i64: 128, 128>}, {pipeline_mode = #tpu.pipeline_mode<synchronous>, transform_indices = @transform_2, window_bounds = array<i64: 128, 128>}, {transform_indices = @transform_3, window_bounds = array<i64: 16, 128>}]} {
    %c0 = arith.constant 0 : index
    %c0_0 = arith.constant 0 : index
    %0 = vector.load %arg1[%c0, %c0_0] : memref<16x128xf32, #tpu.memory_space<vmem>>, vector<16x128xf32>
    %1 = arith.truncf %0 : vector<16x128xf32> to vector<16x128xbf16>
    %c0_1 = arith.constant 0 : index
    %c0_2 = arith.constant 0 : index
    %2 = vector.load %arg2[%c0_1, %c0_2] : memref<128x128xbf16, #tpu.memory_space<vmem>>, vector<128x128xbf16>
    %cst = arith.constant dense<0.000000e+00> : vector<16x128xf32>
    %3 = tpu.matmul %1, %2, %cst {dimension_numbers = #tpu.dot_dimension_numbers<[1], [0], [0], [1], [0, 0, 1, 1], [], []>} : vector<16x128xbf16>, vector<128x128xbf16>, vector<16x128xf32> -> vector<16x128xf32>
    %cst_3 = arith.constant 5.000000e-01 : f32
    %4 = vector.broadcast %cst_3 : f32 to vector<16x128xf32>
    %5 = arith.mulf %4, %3 : vector<16x128xf32>
    %6 = math.tanh %5 : vector<16x128xf32>
    %cst_4 = arith.constant 5.000000e-01 : f32
    %7 = vector.broadcast %cst_4 : f32 to vector<16x128xf32>
    %8 = arith.mulf %7, %6 : vector<16x128xf32>
    %cst_5 = arith.constant 5.000000e-01 : f32
    %9 = vector.broadcast %cst_5 : f32 to vector<16x128xf32>
    %10 = arith.addf %8, %9 : vector<16x128xf32>
    %11 = arith.mulf %10, %0 : vector<16x128xf32>
    %12 = arith.truncf %11 : vector<16x128xf32> to vector<16x128xbf16>
    %c0_6 = arith.constant 0 : index
    %c0_7 = arith.constant 0 : index
    %13 = vector.load %arg3[%c0_6, %c0_7] : memref<128x128xbf16, #tpu.memory_space<vmem>>, vector<128x128xbf16>
    %cst_8 = arith.constant dense<0.000000e+00> : vector<16x128xf32>
    %14 = tpu.matmul %12, %13, %cst_8 {dimension_numbers = #tpu.dot_dimension_numbers<[1], [0], [0], [1], [0, 0, 1, 1], [], []>} : vector<16x128xbf16>, vector<128x128xbf16>, vector<16x128xf32> -> vector<16x128xf32>
    %15 = math.tanh %14 : vector<16x128xf32>
    %cst_9 = arith.constant 1.000000e+00 : f32
    %16 = vector.broadcast %cst_9 : f32 to vector<16x128xf32>
    %17 = arith.subf %16, %10 : vector<16x128xf32>
    %18 = arith.subf %15, %0 : vector<16x128xf32>
    %19 = arith.mulf %17, %18 : vector<16x128xf32>
    %c0_10 = arith.constant 0 : index
    %c0_11 = arith.constant 0 : index
    %20 = vector.load %arg4[%c0_10, %c0_11] : memref<16x128xf32, #tpu.memory_space<vmem>>, vector<16x128xf32>
    tpu.vector_store %arg4[%c0_10, %c0_11], %19 {strides = array<i32>} : memref<16x128xf32, #tpu.memory_space<vmem>>, vector<16x128xf32>,
    return
  }
  func.func @transform_0(%arg0: i32) -> (i32, i32) {
    %c0_i32 = arith.constant 0 : i32
    %c0_i32_0 = arith.constant 0 : i32
    return %arg0, %c0_i32 : i32, i32
  }
  func.func @transform_1(%arg0: i32) -> (i32, i32) {
    %c0_i32 = arith.constant 0 : i32
    %c0_i32_0 = arith.constant 0 : i32
    %c0_i32_1 = arith.constant 0 : i32
    return %c0_i32, %c0_i32_0 : i32, i32
  }
  func.func @transform_2(%arg0: i32) -> (i32, i32) {
    %c0_i32 = arith.constant 0 : i32
    %c0_i32_0 = arith.constant 0 : i32
    %c0_i32_1 = arith.constant 0 : i32
    return %c0_i32, %c0_i32_0 : i32, i32
  }
  func.func @transform_3(%arg0: i32) -> (i32, i32) {
    %c0_i32 = arith.constant 0 : i32
    %c0_i32_0 = arith.constant 0 : i32
    return %arg0, %c0_i32 : i32, i32
  }
}

</mosaic_0001>

<llo_original>
// kernel: tpu_custom_call.1
$region0: #{tpu_custom_call.1}
  #allocation0 [shape = 'u32[]', space=smem, size = 0x4, offset = 0x4, fixed_abs, tag = 'smem constant byte address 0x4 - core index']
  #allocation1 [shape = 'u32[72,128]{1,0:T(1,128)}', space=vmem, size = 0x9000, scoped, tag = 'internal scratch']
  %s0 = inlined_call_operand.hbm [shape: f32[16,128], index: 0, kind: input, shape index: {}]
  %s1 = inlined_call_operand.hbm [shape: bf16[128,128], index: 1, kind: input, shape index: {}]
  %s2 = inlined_call_operand.hbm [shape: bf16[128,128], index: 2, kind: input, shape index: {}]
  %s3 = inlined_call_operand.hbm [shape: f32[16,128], index: 3, kind: output, shape index: {}]
  %s4 = sld [smem:[#allocation0]]
  $region34: #{tpu_custom_call.1} parent=0
    _
  %s6 = ssub.s32 1, %s4
  %s7 = scalar_select 0, %s6, %s4
  $region1: #{tpu_custom_call.1} parent=0
    #allocation2 [shape = 'u8[8192]{0}', space=vmem, size = 0x2000, scoped, tag = 'input window, operand 0, single buffered']
    #allocation3 [shape = 's32[1]{0}', space=sflag, size = 0x4, scoped, tag = 'scoped memory for tpu_custom_call.1']
    #allocation4 [shape = 's32[1]{0}', space=sflag, size = 0x4, scoped, tag = 'scoped memory for tpu_custom_call.1']
    #allocation5 [shape = 'u8[32768]{0}', space=vmem, size = 0x8000, scoped, tag = 'input window, operand 1, single buffered']
    #allocation6 [shape = 's32[1]{0}', space=sflag, size = 0x4, scoped, tag = 'scoped memory for tpu_custom_call.1']
    #allocation7 [shape = 'u8[32768]{0}', space=vmem, size = 0x8000, scoped, tag = 'input window, operand 2, single buffered']
    #allocation8 [shape = 'u8[8192]{0}', space=vmem, size = 0x2000, scoped, tag = 'output window, operand 0, single buffered']
    %8 = vsyncpa [#allocation3], 0
    %9 = vsyncpa [#allocation6], 0
    %10 = vsyncpa [#allocation4], 0
    // Predicated region
    $region2: #{tpu_custom_call.1} parent=1 // pred_check
      _
    $region3: #{tpu_custom_call.1} parent=1 // pred_check_branch
      %12 = sbr.rel (0) target = $region5
    $region4: #{tpu_custom_call.1} parent=1 // pred_region
      %14 = vsyncadd [#allocation3], 0
      %s15 = sshll.u32 %s0, 4
      %s16 = int_to_ptr.hbm [resolvable:$true] %s15
      %s17 = sshll.u32 [#allocation2], 4
      %s18 = int_to_ptr.vmem [resolvable:$true] %s17
      %23 = dma.hbm_to_vmem [thread:$0]  %s16, 256, %s18, [#allocation3], 128, 128, 8
    $region5: #{tpu_custom_call.1} parent=1 // pred_fallthru
      _
    // Predicated region
    $region6: #{tpu_custom_call.1} parent=1 // pred_check
      _
    $region7: #{tpu_custom_call.1} parent=1 // pred_check_branch
      %25 = sbr.rel (0) target = $region9
    $region8: #{tpu_custom_call.1} parent=1 // pred_region
      %27 = vsyncadd [#allocation6], 0
      %s28 = sshll.u32 %s1, 4
      %s29 = int_to_ptr.hbm [resolvable:$true] %s28
      %s30 = sshll.u32 [#allocation5], 4
      %s31 = int_to_ptr.vmem [resolvable:$true] %s30
      %36 = dma.hbm_to_vmem [thread:$0]  %s29, 1024, %s31, [#allocation6], 64, 64, 4
    $region9: #{tpu_custom_call.1} parent=1 // pred_fallthru
      _
    // Predicated region
    $region10: #{tpu_custom_call.1} parent=1 // pred_check
      _
    $region11: #{tpu_custom_call.1} parent=1 // pred_check_branch
      %38 = sbr.rel (0) target = $region13
    $region12: #{tpu_custom_call.1} parent=1 // pred_region
      %40 = vsyncadd [#allocation6], 0
      %s41 = sshll.u32 %s2, 4
      %s42 = int_to_ptr.hbm [resolvable:$true] %s41
      %s43 = sshll.u32 [#allocation7], 4
      %s44 = int_to_ptr.vmem [resolvable:$true] %s43
      %49 = dma.hbm_to_vmem [thread:$0]  %s42, 1024, %s44, [#allocation6], 64, 64, 4
    $region13: #{tpu_custom_call.1} parent=1 // pred_fallthru
      _
    // Predicated region
    $region14: #{tpu_custom_call.1} parent=1 // pred_check
      _
    $region15: #{tpu_custom_call.1} parent=1 // pred_check_branch
      %51 = sbr.rel (0) target = $region17
    $region16: #{tpu_custom_call.1} parent=1 // pred_region
      %53 = dma.done [#allocation3], 256
    $region17: #{tpu_custom_call.1} parent=1 // pred_fallthru
      _
    // Predicated region
    $region18: #{tpu_custom_call.1} parent=1 // pred_check
      _
    $region19: #{tpu_custom_call.1} parent=1 // pred_check_branch
      %55 = sbr.rel (0) target = $region21
    $region20: #{tpu_custom_call.1} parent=1 // pred_region
      %57 = dma.done [#allocation6], 1024
    $region21: #{tpu_custom_call.1} parent=1 // pred_fallthru
      _
    // Predicated region
    $region22: #{tpu_custom_call.1} parent=1 // pred_check
      _
    $region23: #{tpu_custom_call.1} parent=1 // pred_check_branch
      %59 = sbr.rel (0) target = $region25
    $region24: #{tpu_custom_call.1} parent=1 // pred_region
      %61 = dma.done [#allocation6], 1024
    $region25: #{tpu_custom_call.1} parent=1 // pred_fallthru
      _
    %v62 = vld [vmem:[#allocation2] sm:$0xff]
    %v63 = vld [vmem:[#allocation2 + $0x8] sm:$0xff]
    %v64 = vpack.c.bf16 %v63, %v62
    %v65 = vld [vmem:[#allocation5] sm:$0xf]
    %v66 = vld [vmem:[#allocation5 + $0x4] sm:$0xf]
    %v67 = vld [vmem:[#allocation5 + $0x8] sm:$0xf]
    %v68 = vld [vmem:[#allocation5 + $0xc] sm:$0xf]
    %v69 = vld [vmem:[#allocation5 + $0x10] sm:$0xf]
    %v70 = vld [vmem:[#allocation5 + $0x14] sm:$0xf]
    %v71 = vld [vmem:[#allocation5 + $0x18] sm:$0xf]
    %v72 = vld [vmem:[#allocation5 + $0x1c] sm:$0xf]
    %v73 = vld [vmem:[#allocation5 + $0x20] sm:$0xf]
    %v74 = vld [vmem:[#allocation5 + $0x24] sm:$0xf]
    %v75 = vld [vmem:[#allocation5 + $0x28] sm:$0xf]
    %v76 = vld [vmem:[#allocation5 + $0x2c] sm:$0xf]
    %v77 = vld [vmem:[#allocation5 + $0x30] sm:$0xf]
    %v78 = vld [vmem:[#allocation5 + $0x34] sm:$0xf]
    %v79 = vld [vmem:[#allocation5 + $0x38] sm:$0xf]
    %v80 = vld [vmem:[#allocation5 + $0x3c] sm:$0xf]
    %v97 = vunpack.c.l.b16 %v65
    %v98 = vunpack.c.l.b16 %v66
    %v99 = vunpack.c.l.b16 %v67
    %v100 = vunpack.c.l.b16 %v68
    %v101 = vunpack.c.l.b16 %v69
    %v102 = vunpack.c.l.b16 %v70
    %v103 = vunpack.c.l.b16 %v71
    %v104 = vunpack.c.l.b16 %v72
    %v105 = vunpack.c.l.b16 %v73
    %v106 = vunpack.c.l.b16 %v74
    %v107 = vunpack.c.l.b16 %v75
    %v108 = vunpack.c.l.b16 %v76
    %v109 = vunpack.c.l.b16 %v77
    %v110 = vunpack.c.l.b16 %v78
    %v111 = vunpack.c.l.b16 %v79
    %v112 = vunpack.c.l.b16 %v80
    %v113 = vpack.c.b16 %v98, %v97
    %v114 = vpack.c.b16 %v100, %v99
    %v115 = vpack.c.b16 %v102, %v101
    %v116 = vpack.c.b16 %v104, %v103
    %v117 = vpack.c.b16 %v106, %v105
    %v118 = vpack.c.b16 %v108, %v107
    %v119 = vpack.c.b16 %v110, %v109
    %v120 = vpack.c.b16 %v112, %v111
    %129 = vmatpush.bf16.msra.mxu0 %v120
    %130 = vmatpush.bf16.msra.mxu0 %v119
    %131 = vmatpush.bf16.msra.mxu0 %v118
    %132 = vmatpush.bf16.msra.mxu0 %v117
    %133 = vmatpush.bf16.msra.mxu0 %v116
    %134 = vmatpush.bf16.msra.mxu0 %v115
    %135 = vmatpush.bf16.msra.mxu0 %v114
    %136 = vmatpush.bf16.msra.mxu0 %v113
    %137 = vmatmul.bf16.gmra.mxu0 %v64
    %v138 = vpop.f32.mrf.mxu0
    %v139 = vadd.f32 0.0, %v138
    %v140 = vpop.f32.mrf.mxu0
    %v141 = vadd.f32 0.0, %v140
    %142 = vdwg.mxu0
    %v143 = vmul.f32 %v139, 0.5
    %v144 = vmul.f32 %v141, 0.5
    %v145 = vtanh.pop %v143
    %v146 = vtanh.pop %v144
    %v147 = vmul.f32 %v145, 0.5
    %v148 = vmul.f32 %v146, 0.5
    %v149 = vadd.f32 %v147, 0.5
    %v150 = vadd.f32 %v148, 0.5
    %v151 = vmul.f32 %v149, %v62
    %v152 = vmul.f32 %v150, %v63
    %v153 = vpack.c.bf16 %v152, %v151
    %v154 = vld [vmem:[#allocation7] sm:$0xf]
    %v155 = vld [vmem:[#allocation7 + $0x4] sm:$0xf]
    %v156 = vld [vmem:[#allocation7 + $0x8] sm:$0xf]
    %v157 = vld [vmem:[#allocation7 + $0xc] sm:$0xf]
    %v158 = vld [vmem:[#allocation7 + $0x10] sm:$0xf]
    %v159 = vld [vmem:[#allocation7 + $0x14] sm:$0xf]
    %v160 = vld [vmem:[#allocation7 + $0x18] sm:$0xf]
    %v161 = vld [vmem:[#allocation7 + $0x1c] sm:$0xf]
    %v162 = vld [vmem:[#allocation7 + $0x20] sm:$0xf]
    %v163 = vld [vmem:[#allocation7 + $0x24] sm:$0xf]
    %v164 = vld [vmem:[#allocation7 + $0x28] sm:$0xf]
    %v165 = vld [vmem:[#allocation7 + $0x2c] sm:$0xf]
    %v166 = vld [vmem:[#allocation7 + $0x30] sm:$0xf]
    %v167 = vld [vmem:[#allocation7 + $0x34] sm:$0xf]
    %v168 = vld [vmem:[#allocation7 + $0x38] sm:$0xf]
    %v169 = vld [vmem:[#allocation7 + $0x3c] sm:$0xf]
    %v186 = vunpack.c.l.b16 %v154
    %v187 = vunpack.c.l.b16 %v155
    %v188 = vunpack.c.l.b16 %v156
    %v189 = vunpack.c.l.b16 %v157
    %v190 = vunpack.c.l.b16 %v158
    %v191 = vunpack.c.l.b16 %v159
    %v192 = vunpack.c.l.b16 %v160
    %v193 = vunpack.c.l.b16 %v161
    %v194 = vunpack.c.l.b16 %v162
    %v195 = vunpack.c.l.b16 %v163
    %v196 = vunpack.c.l.b16 %v164
    %v197 = vunpack.c.l.b16 %v165
    %v198 = vunpack.c.l.b16 %v166
    %v199 = vunpack.c.l.b16 %v167
    %v200 = vunpack.c.l.b16 %v168
    %v201 = vunpack.c.l.b16 %v169
    %v202 = vpack.c.b16 %v187, %v186
    %v203 = vpack.c.b16 %v189, %v188
    %v204 = vpack.c.b16 %v191, %v190
    %v205 = vpack.c.b16 %v193, %v192
    %v206 = vpack.c.b16 %v195, %v194
    %v207 = vpack.c.b16 %v197, %v196
    %v208 = vpack.c.b16 %v199, %v198
    %v209 = vpack.c.b16 %v201, %v200
    %218 = vmatpush.bf16.msra.mxu0 %v209
    %219 = vmatpush.bf16.msra.mxu0 %v208
    %220 = vmatpush.bf16.msra.mxu0 %v207
    %221 = vmatpush.bf16.msra.mxu0 %v206
    %222 = vmatpush.bf16.msra.mxu0 %v205
    %223 = vmatpush.bf16.msra.mxu0 %v204
    %224 = vmatpush.bf16.msra.mxu0 %v203
    %225 = vmatpush.bf16.msra.mxu0 %v202
    %226 = vmatmul.bf16.gmra.mxu0 %v153
    %v227 = vpop.f32.mrf.mxu0
    %v228 = vadd.f32 0.0, %v227
    %v229 = vpop.f32.mrf.mxu0
    %v230 = vadd.f32 0.0, %v229
    %231 = vdwg.mxu0
    %v232 = vtanh.pop %v228
    %v233 = vtanh.pop %v230
    %v234 = vsub.f32 1.0, %v149
    %v235 = vsub.f32 1.0, %v150
    %v236 = vsub.f32 %v232, %v62
    %v237 = vsub.f32 %v233, %v63
    %v238 = vmul.f32 %v234, %v236
    %v239 = vmul.f32 %v235, %v237
    %240 = vst [vmem:[#allocation8] sm:$0xff] %v238
    %241 = vst [vmem:[#allocation8 + $0x8] sm:$0xff] %v239
    // Predicated region
    $region26: #{tpu_custom_call.1} parent=1 // pred_check
      _
    $region27: #{tpu_custom_call.1} parent=1 // pred_check_branch
      %243 = sbr.rel (0) target = $region29
    $region28: #{tpu_custom_call.1} parent=1 // pred_region
      %245 = vsyncadd [#allocation4], 0
      %s246 = sshll.u32 [#allocation8], 4
      %s247 = int_to_ptr.vmem [resolvable:$true] %s246
      %s248 = sshll.u32 %s3, 4
      %s249 = int_to_ptr.hbm [resolvable:$true] %s248
      %254 = dma.vmem_to_hbm [thread:$0]  %s247, 256, %s249, [#allocation4], 128, 128, 8
    $region29: #{tpu_custom_call.1} parent=1 // pred_fallthru
      _
    // Predicated region
    $region30: #{tpu_custom_call.1} parent=1 // pred_check
      _
    $region31: #{tpu_custom_call.1} parent=1 // pred_check_branch
      %256 = sbr.rel (0) target = $region33
    $region32: #{tpu_custom_call.1} parent=1 // pred_region
      %258 = dma.done [#allocation4], 256
    $region33: #{tpu_custom_call.1} parent=1 // pred_fallthru
      _
    %259 = vsyncpa [#allocation3], 1
    %260 = vsyncpa [#allocation6], 1
    %261 = vsyncpa [#allocation4], 1

</llo_original>
